<compile_context>
chip_gen: v6e
topology: v6e:2x2x1
jax: 0.10.0
libtpu: 0.0.40
codegen_flags: <defaults>
</compile_context>

<pallas_src>
import functools
import math

import jax
import jax.numpy as jnp
from jax.experimental import pallas as pl
from jax.experimental.pallas import tpu as pltpu


def _layernorm_kernel(x_ref, a_ref, b_ref, o_ref, *, eps, feat):
    # x_ref: (tile_rows, feat) block in VMEM; a_ref/b_ref: (1, feat) f32.
    x = x_ref[...].astype(jnp.float32)
    n = jnp.float32(feat)
    # Two-pass statistics: x is already resident in VMEM, so the second pass is
    # pure VPU/XLU work that hides completely under the DMA pipeline, and it
    # avoids the catastrophic cancellation of E[x^2] - E[x]^2.
    mean = jnp.sum(x, axis=-1, keepdims=True) / n                       # (rows, 1)
    diff = x - mean
    var = jnp.sum(diff * diff, axis=-1, keepdims=True) / jnp.float32(feat - 1)
    std = jnp.sqrt(var)
    # Exact per-row reciprocal: only tile_rows divides per block (negligible),
    # keeps full f32 accuracy (approx=True cost ~1e-2 abs error here).
    inv = pl.reciprocal(std + jnp.float32(eps), approx=False)           # (rows, 1)
    out = diff * inv * a_ref[...] + b_ref[...]
    o_ref[...] = out.astype(o_ref.dtype)


def _round_up(x, m):
    return -(-x // m) * m


def _tpu_info_and_vmem():
    try:
        info = pltpu.get_tpu_info()
    except Exception:
        info = None
    # Fall back to the smallest per-core VMEM (v7x: 64 MiB) when unknown.
    vmem = getattr(info, "vmem_capacity_bytes", None) if info is not None else None
    if not vmem:
        vmem = 64 * 1024 * 1024
    return info, int(vmem)


def _choose_tile_rows(rows, feat, in_itemsize, out_itemsize, vmem_budget, info):
    # Sublane granularity: 8 rows for 32-bit, 16 for bf16, 32 for 8-bit.
    sub = 8 if in_itemsize >= 4 else (16 if in_itemsize == 2 else 32)
    # Target ~4 MiB of *input* per block: large enough to amortize the ~0.35 us
    # per-grid-step overhead and sit near the measured HBM roofline.
    target_block_bytes = 4 * 1024 * 1024
    tile = max(sub, (target_block_bytes // max(1, feat * in_itemsize)) // sub * sub)
    # Dtype-aware VMEM accounting: double-buffered input + output buffers plus
    # ~2 f32 temporaries inside the kernel body.
    per_row = feat * (2 * in_itemsize + 2 * out_itemsize + 2 * 4)
    cap = max(sub, (vmem_budget // per_row) // sub * sub)
    tile = min(tile, cap)
    rows_r = _round_up(rows, sub)
    tile = min(tile, rows_r)
    # Multi-TensorCore chips (v7x): aim for >= 4 grid steps per core so each
    # core keeps a real double-buffered pipeline. No-op on single-TC v5e/v6e
    # (and when the core count is unknown).
    num_cores = getattr(info, "num_cores", 1) if info is not None else 1
    if isinstance(num_cores, int) and num_cores > 1:
        want_steps = 4 * num_cores
        if rows_r >= want_steps * sub:
            tile = min(tile, max(sub, (rows_r // want_steps) // sub * sub))
    return max(sub, tile)


def layer_norm(x, a_2, b_2, eps=1e-6, tile_rows=None):
    orig_shape = x.shape
    feat = orig_shape[-1]
    rows = math.prod(orig_shape[:-1]) if len(orig_shape) > 1 else 1

    # Small feature dims (< 128 lanes) would force lane-masked partial stores;
    # plain XLA is the right tool there (feat == 1 also makes ddof=1 NaN,
    # matching the PyTorch module).
    if feat < 128:
        mean = jnp.mean(x, axis=-1, keepdims=True)
        std = jnp.std(x, axis=-1, keepdims=True, ddof=1)
        return (a_2 * (x - mean) / (std + eps) + b_2).astype(x.dtype)

    x2 = x.reshape(rows, feat)
    # Pre-cast gamma/beta once in the wrapper (avoid per-grid-step casts).
    a2 = a_2.reshape(1, feat).astype(jnp.float32)
    b2 = b_2.reshape(1, feat).astype(jnp.float32)

    in_itemsize = jnp.dtype(x.dtype).itemsize
    out_itemsize = in_itemsize

    info, vmem_cap = _tpu_info_and_vmem()
    # Generation-aware: ~76 MiB budget / 96 MiB limit on 128-MiB chips
    # (v5e/v6e), ~38 MiB / 48 MiB on 64-MiB v7x.
    vmem_budget = int(vmem_cap * 0.6)
    vmem_limit = int(vmem_cap * 0.75)

    if tile_rows is None:
        tile_rows = _choose_tile_rows(
            rows, feat, in_itemsize, out_itemsize, vmem_budget, info)

    grid = (pl.cdiv(rows, tile_rows),)

    kernel = functools.partial(_layernorm_kernel, eps=eps, feat=feat)

    cost = pl.CostEstimate(
        flops=8 * rows * feat,
        transcendentals=2 * rows,
        bytes_accessed=rows * feat * (in_itemsize + out_itemsize) + 2 * feat * 4,
    )

    out = pl.pallas_call(
        kernel,
        out_shape=jax.ShapeDtypeStruct((rows, feat), x.dtype),
        grid_spec=pltpu.PrefetchScalarGridSpec(
            num_scalar_prefetch=0,
            grid=grid,
            in_specs=[
                pl.BlockSpec((tile_rows, feat), lambda i: (i, 0)),
                pl.BlockSpec((1, feat), lambda i: (0, 0)),
                pl.BlockSpec((1, feat), lambda i: (0, 0)),
            ],
            out_specs=pl.BlockSpec((tile_rows, feat), lambda i: (i, 0)),
        ),
        compiler_params=pltpu.CompilerParams(
            dimension_semantics=("parallel",),
            vmem_limit_bytes=vmem_limit,
        ),
        cost_estimate=cost,
    )(x2, a2, b2)

    return out.reshape(orig_shape)


def _ref_layernorm(x, a_2, b_2, eps):
    mean = jnp.mean(x, axis=-1, keepdims=True)
    std = jnp.std(x, axis=-1, keepdims=True, ddof=1)
    return a_2 * (x - mean) / (std + eps) + b_2


if __name__ == "__main__":
    # Shapes consistent with the annotated transformer: (batch, seq, d_model).
    batch, seq, d_model = 2, 8, 512
    key = jax.random.PRNGKey(0)
    x = jax.random.normal(key, (batch, seq, d_model), dtype=jnp.float32)

    # Deterministic parameter init, same as nn.Parameter(ones)/(zeros).
    a_2 = jnp.ones((d_model,), dtype=jnp.float32)
    b_2 = jnp.zeros((d_model,), dtype=jnp.float32)

    y = layer_norm(x, a_2, b_2, eps=1e-6)
    jax.block_until_ready(y)
    ref = _ref_layernorm(x, a_2, b_2, 1e-6)
    assert jnp.allclose(y, ref, atol=1e-5, rtol=1e-5), float(jnp.max(jnp.abs(y - ref)))

    # Ragged-tail path (rows not a multiple of tile_rows, no padding/slicing).
    x3 = jax.random.normal(jax.random.PRNGKey(2), (3, 8, 256), jnp.float32)
    a3 = jax.random.normal(jax.random.PRNGKey(3), (256,), jnp.float32)
    b3 = jax.random.normal(jax.random.PRNGKey(4), (256,), jnp.float32)
    y3 = layer_norm(x3, a3, b3, eps=1e-6, tile_rows=16)   # 24 rows -> 2 blocks, 2nd ragged
    jax.block_until_ready(y3)
    ref3 = _ref_layernorm(x3, a3, b3, 1e-6)
    assert jnp.allclose(y3, ref3, atol=1e-5, rtol=1e-5), float(jnp.max(jnp.abs(y3 - ref3)))

    # Small-feature path (< 128 lanes) goes through the XLA fallback.
    x_small = jax.random.normal(jax.random.PRNGKey(1), (batch, seq, 32), jnp.float32)
    y_small = layer_norm(x_small, jnp.ones((32,)), jnp.zeros((32,)), eps=1e-6)
    jax.block_until_ready(y_small)
    ref_small = _ref_layernorm(x_small, jnp.ones((32,)), jnp.zeros((32,)), 1e-6)
    assert jnp.allclose(y_small, ref_small, atol=1e-5, rtol=1e-5)

    print("KERNEL_OK")
</pallas_src>

<mosaic_0001>
module attributes {stable_mosaic.version = 11 : i64} {
  func.func @_layernorm_kernel(%arg0: i32, %arg1: memref<16x512xf32, #tpu.memory_space<vmem>>, %arg2: memref<1x512xf32, #tpu.memory_space<vmem>>, %arg3: memref<1x512xf32, #tpu.memory_space<vmem>>, %arg4: memref<16x512xf32, #tpu.memory_space<vmem>>) attributes {dimension_semantics = [#tpu.dimension_semantics<parallel>], iteration_bounds = array<i64: 1>, scalar_prefetch = 0 : i64, scratch_operands = 0 : i64, tpu.core_type = #tpu.core_type<tc>, window_params = [{transform_indices = @transform_0, window_bounds = array<i64: 16, 512>}, {pipeline_mode = #tpu.pipeline_mode<synchronous>, transform_indices = @transform_1, window_bounds = array<i64: 1, 512>}, {pipeline_mode = #tpu.pipeline_mode<synchronous>, transform_indices = @transform_2, window_bounds = array<i64: 1, 512>}, {transform_indices = @transform_3, window_bounds = array<i64: 16, 512>}]} {
    %c0 = arith.constant 0 : index
    %c0_0 = arith.constant 0 : index
    %0 = vector.load %arg1[%c0, %c0_0] : memref<16x512xf32, #tpu.memory_space<vmem>>, vector<16x512xf32>
    %cst = arith.constant dense<0.000000e+00> : vector<16xf32>
    %1 = vector.multi_reduction <add>, %0, %cst [1] : vector<16x512xf32> to vector<16xf32>
    %2 = vector.shape_cast %1 : vector<16xf32> to vector<16x1xf32>
    %cst_1 = arith.constant 5.120000e+02 : f32
    %3 = vector.broadcast %cst_1 : f32 to vector<16x1xf32>
    %4 = arith.divf %2, %3 : vector<16x1xf32>
    %5 = vector.broadcast %4 : vector<16x1xf32> to vector<16x512xf32>
    %6 = arith.subf %0, %5 : vector<16x512xf32>
    %7 = arith.mulf %6, %6 : vector<16x512xf32>
    %cst_2 = arith.constant dense<0.000000e+00> : vector<16xf32>
    %8 = vector.multi_reduction <add>, %7, %cst_2 [1] : vector<16x512xf32> to vector<16xf32>
    %9 = vector.shape_cast %8 : vector<16xf32> to vector<16x1xf32>
    %cst_3 = arith.constant 5.110000e+02 : f32
    %10 = vector.broadcast %cst_3 : f32 to vector<16x1xf32>
    %11 = arith.divf %9, %10 : vector<16x1xf32>
    %12 = math.sqrt %11 : vector<16x1xf32>
    %cst_4 = arith.constant 9.99999997E-7 : f32
    %13 = vector.broadcast %cst_4 : f32 to vector<16x1xf32>
    %14 = arith.addf %12, %13 : vector<16x1xf32>
    %15 = tpu.reciprocal %14 : vector<16x1xf32> -> vector<16x1xf32>
    %16 = vector.broadcast %15 : vector<16x1xf32> to vector<16x512xf32>
    %17 = arith.mulf %6, %16 : vector<16x512xf32>
    %c0_5 = arith.constant 0 : index
    %c0_6 = arith.constant 0 : index
    %18 = vector.load %arg2[%c0_5, %c0_6] : memref<1x512xf32, #tpu.memory_space<vmem>>, vector<1x512xf32>
    %19 = vector.broadcast %18 : vector<1x512xf32> to vector<16x512xf32>
    %20 = arith.mulf %17, %19 : vector<16x512xf32>
    %c0_7 = arith.constant 0 : index
    %c0_8 = arith.constant 0 : index
    %21 = vector.load %arg3[%c0_7, %c0_8] : memref<1x512xf32, #tpu.memory_space<vmem>>, vector<1x512xf32>
    %22 = vector.broadcast %21 : vector<1x512xf32> to vector<16x512xf32>
    %23 = arith.addf %20, %22 : vector<16x512xf32>
    %c0_9 = arith.constant 0 : index
    %c0_10 = arith.constant 0 : index
    %24 = vector.load %arg4[%c0_9, %c0_10] : memref<16x512xf32, #tpu.memory_space<vmem>>, vector<16x512xf32>
    tpu.vector_store %arg4[%c0_9, %c0_10], %23 {strides = array<i32>} : memref<16x512xf32, #tpu.memory_space<vmem>>, vector<16x512xf32>,
    return
  }
  func.func @transform_0(%arg0: i32) -> (i32, i32) {
    %c0_i32 = arith.constant 0 : i32
    %c0_i32_0 = arith.constant 0 : i32
    return %arg0, %c0_i32 : i32, i32
  }
  func.func @transform_1(%arg0: i32) -> (i32, i32) {
    %c0_i32 = arith.constant 0 : i32
    %c0_i32_0 = arith.constant 0 : i32
    %c0_i32_1 = arith.constant 0 : i32
    return %c0_i32, %c0_i32_0 : i32, i32
  }
  func.func @transform_2(%arg0: i32) -> (i32, i32) {
    %c0_i32 = arith.constant 0 : i32
    %c0_i32_0 = arith.constant 0 : i32
    %c0_i32_1 = arith.constant 0 : i32
    return %c0_i32, %c0_i32_0 : i32, i32
  }
  func.func @transform_3(%arg0: i32) -> (i32, i32) {
    %c0_i32 = arith.constant 0 : i32
    %c0_i32_0 = arith.constant 0 : i32
    return %arg0, %c0_i32 : i32, i32
  }
}

</mosaic_0001>

<llo_original>
// kernel: tpu_custom_call.1
$region0: #{tpu_custom_call.1}
  #allocation0 [shape = 'u32[]', space=smem, size = 0x4, offset = 0x4, fixed_abs, tag = 'smem constant byte address 0x4 - core index']
  #allocation1 [shape = 'u32[144,128]{1,0:T(1,128)}', space=vmem, size = 0x12000, scoped, tag = 'internal scratch']
  %s0 = inlined_call_operand.hbm [shape: f32[16,512], index: 0, kind: input, shape index: {}]
  %s1 = inlined_call_operand.hbm [shape: f32[1,512], index: 1, kind: input, shape index: {}]
  %s2 = inlined_call_operand.hbm [shape: f32[1,512], index: 2, kind: input, shape index: {}]
  %s3 = inlined_call_operand.hbm [shape: f32[16,512], index: 3, kind: output, shape index: {}]
  %s4 = sld [smem:[#allocation0]]
  $region34: #{tpu_custom_call.1} parent=0
    _
  %s6 = ssub.s32 1, %s4
  %s7 = scalar_select 0, %s6, %s4
  $region1: #{tpu_custom_call.1} parent=0
    #allocation2 [shape = 'u8[32768]{0}', space=vmem, size = 0x8000, scoped, tag = 'input window, operand 0, single buffered']
    #allocation3 [shape = 's32[1]{0}', space=sflag, size = 0x4, scoped, tag = 'scoped memory for tpu_custom_call.1']
    #allocation4 [shape = 's32[1]{0}', space=sflag, size = 0x4, scoped, tag = 'scoped memory for tpu_custom_call.1']
    #allocation5 [shape = 'u8[2048]{0}', space=vmem, size = 0x800, scoped, tag = 'input window, operand 1, single buffered']
    #allocation6 [shape = 's32[1]{0}', space=sflag, size = 0x4, scoped, tag = 'scoped memory for tpu_custom_call.1']
    #allocation7 [shape = 'u8[2048]{0}', space=vmem, size = 0x800, scoped, tag = 'input window, operand 2, single buffered']
    #allocation8 [shape = 'u8[32768]{0}', space=vmem, size = 0x8000, scoped, tag = 'output window, operand 0, single buffered']
    %8 = vsyncpa [#allocation3], 0
    %9 = vsyncpa [#allocation6], 0
    %10 = vsyncpa [#allocation4], 0
    // Predicated region
    $region2: #{tpu_custom_call.1} parent=1 // pred_check
      _
    $region3: #{tpu_custom_call.1} parent=1 // pred_check_branch
      %12 = sbr.rel (0) target = $region5
    $region4: #{tpu_custom_call.1} parent=1 // pred_region
      %s14 = ssub.s32 1024, 1024
      %15 = vsyncadd [#allocation3], %s14
      %s16 = sshll.u32 [#allocation2], 4
      %s17 = int_to_ptr.vmem [resolvable:$true] %s16
      %22 = dma.hbm_to_vmem [thread:$0]  %s0, 1024, %s17, [#allocation3], 512, 512, 32
    $region5: #{tpu_custom_call.1} parent=1 // pred_fallthru
      _
    // Predicated region
    $region6: #{tpu_custom_call.1} parent=1 // pred_check
      _
    $region7: #{tpu_custom_call.1} parent=1 // pred_check_branch
      %24 = sbr.rel (0) target = $region9
    $region8: #{tpu_custom_call.1} parent=1 // pred_region
      %s26 = ssub.s32 64, 64
      %27 = vsyncadd [#allocation6], %s26
      %s29 = sshll.u32 [#allocation5], 4
      %s30 = int_to_ptr.vmem [resolvable:$true] %s29
      %32 = dma.hbm_to_vmem [thread:$0]  %s1, 64, %s30, [#allocation6]
    $region9: #{tpu_custom_call.1} parent=1 // pred_fallthru
      _
    // Predicated region
    $region10: #{tpu_custom_call.1} parent=1 // pred_check
      _
    $region11: #{tpu_custom_call.1} parent=1 // pred_check_branch
      %34 = sbr.rel (0) target = $region13
    $region12: #{tpu_custom_call.1} parent=1 // pred_region
      %s36 = ssub.s32 64, 64
      %37 = vsyncadd [#allocation6], %s36
      %s39 = sshll.u32 [#allocation7], 4
      %s40 = int_to_ptr.vmem [resolvable:$true] %s39
      %42 = dma.hbm_to_vmem [thread:$0]  %s2, 64, %s40, [#allocation6]
    $region13: #{tpu_custom_call.1} parent=1 // pred_fallthru
      _
    // Predicated region
    $region14: #{tpu_custom_call.1} parent=1 // pred_check
      _
    $region15: #{tpu_custom_call.1} parent=1 // pred_check_branch
      %44 = sbr.rel (0) target = $region17
    $region16: #{tpu_custom_call.1} parent=1 // pred_region
      %45 = dma.done [#allocation3], 1024
    $region17: #{tpu_custom_call.1} parent=1 // pred_fallthru
      _
    // Predicated region
    $region18: #{tpu_custom_call.1} parent=1 // pred_check
      _
    $region19: #{tpu_custom_call.1} parent=1 // pred_check_branch
      %47 = sbr.rel (0) target = $region21
    $region20: #{tpu_custom_call.1} parent=1 // pred_region
      %48 = dma.done [#allocation6], 64
    $region21: #{tpu_custom_call.1} parent=1 // pred_fallthru
      _
    // Predicated region
    $region22: #{tpu_custom_call.1} parent=1 // pred_check
      _
    $region23: #{tpu_custom_call.1} parent=1 // pred_check_branch
      %50 = sbr.rel (0) target = $region25
    $region24: #{tpu_custom_call.1} parent=1 // pred_region
      %51 = dma.done [#allocation6], 64
    $region25: #{tpu_custom_call.1} parent=1 // pred_fallthru
      _
    %v52 = vld [vmem:[#allocation2] sm:$0xff]
    %v53 = vld [vmem:[#allocation2 + $0x8] sm:$0xff]
    %v54 = vld [vmem:[#allocation2 + $0x10] sm:$0xff]
    %v55 = vld [vmem:[#allocation2 + $0x18] sm:$0xff]
    %v56 = vld [vmem:[#allocation2 + $0x20] sm:$0xff]
    %v57 = vld [vmem:[#allocation2 + $0x28] sm:$0xff]
    %v58 = vld [vmem:[#allocation2 + $0x30] sm:$0xff]
    %v59 = vld [vmem:[#allocation2 + $0x38] sm:$0xff]
    %v60 = vadd.f32 %v52, %v53
    %v61 = vadd.f32 %v60, %v54
    %v62 = vadd.f32 %v61, %v55
    %63 = vadd.xlane.f32.xlu0 %v62
    %v64 = vpop.xlane.xlu0 %63
    %v65 = vadd.f32 %v56, %v57
    %v66 = vadd.f32 %v65, %v58
    %v67 = vadd.f32 %v66, %v59
    %68 = vadd.xlane.f32.xlu0 %v67
    %v69 = vpop.xlane.xlu0 %68
    %v70 = vrcp.pop 512.0
    %v71 = vmul.f32 %v64, %v70
    %v72 = vmul.f32 %v69, %v70
    %v73 = vsub.f32 %v52, %v71
    %v74 = vsub.f32 %v53, %v71
    %v75 = vsub.f32 %v54, %v71
    %v76 = vsub.f32 %v55, %v71
    %v77 = vsub.f32 %v56, %v72
    %v78 = vsub.f32 %v57, %v72
    %v79 = vsub.f32 %v58, %v72
    %v80 = vsub.f32 %v59, %v72
    %v81 = vmul.f32 %v73, %v73
    %v82 = vmul.f32 %v74, %v74
    %v83 = vmul.f32 %v75, %v75
    %v84 = vmul.f32 %v76, %v76
    %v85 = vmul.f32 %v77, %v77
    %v86 = vmul.f32 %v78, %v78
    %v87 = vmul.f32 %v79, %v79
    %v88 = vmul.f32 %v80, %v80
    %v89 = vadd.f32 %v81, %v82
    %v90 = vadd.f32 %v89, %v83
    %v91 = vadd.f32 %v90, %v84
    %92 = vadd.xlane.f32.xlu0 %v91
    %v93 = vpop.xlane.xlu0 %92
    %v94 = vadd.f32 %v85, %v86
    %v95 = vadd.f32 %v94, %v87
    %v96 = vadd.f32 %v95, %v88
    %97 = vadd.xlane.f32.xlu0 %v96
    %v98 = vpop.xlane.xlu0 %97
    %v99 = vrcp.pop 511.0
    %v100 = vmul.f32 %v93, %v99
    %v101 = vmul.f32 %v98, %v99
    %v102 = vrsqrt.pop %v100
    %v103 = vmul.f32 %v100, %v102
    %vm104 = vcmp.eq.f32.partialorder %v100, inf
    %v105 = vsel %vm104, %v100, %v103
    %vm106 = vcmp.eq.f32.partialorder %v100, 0.0
    %v107 = vand.u32 %v100, 2147483648
    %v108 = vsel %vm106, %v107, %v105
    %v109 = vrsqrt.pop %v101
    %v110 = vmul.f32 %v101, %v109
    %vm111 = vcmp.eq.f32.partialorder %v101, inf
    %v112 = vsel %vm111, %v101, %v110
    %vm113 = vcmp.eq.f32.partialorder %v101, 0.0
    %v114 = vand.u32 %v101, 2147483648
    %v115 = vsel %vm113, %v114, %v112
    %v116 = vadd.f32 %v108, 1e-06
    %v117 = vadd.f32 %v115, 1e-06
    %v118 = vrcp.pop %v116
    %v119 = vrcp.pop %v117
    %v120 = vmul.f32 %v73, %v118
    %v121 = vmul.f32 %v74, %v118
    %v122 = vmul.f32 %v75, %v118
    %v123 = vmul.f32 %v76, %v118
    %v124 = vmul.f32 %v77, %v119
    %v125 = vmul.f32 %v78, %v119
    %v126 = vmul.f32 %v79, %v119
    %v127 = vmul.f32 %v80, %v119
    %v128 = vld [vmem:[#allocation5] sm:$0xf]
    %v130 = vlaneseq
    %v131 = vshrl.u32 %v130, 7
    %v132 = vsub.s32 0, %v131
    %v133 = vrot.slane %v128, %v132
    %v134 = vlaneseq
    %v135 = vshrl.u32 %v134, 7
    %v136 = vsub.s32 1, %v135
    %v137 = vrot.slane %v128, %v136
    %v138 = vlaneseq
    %v139 = vshrl.u32 %v138, 7
    %v140 = vsub.s32 2, %v139
    %v141 = vrot.slane %v128, %v140
    %v142 = vlaneseq
    %v143 = vshrl.u32 %v142, 7
    %v144 = vsub.s32 3, %v143
    %v145 = vrot.slane %v128, %v144
    %v150 = vmul.f32 %v120, %v133
    %v151 = vmul.f32 %v121, %v137
    %v152 = vmul.f32 %v122, %v141
    %v153 = vmul.f32 %v123, %v145
    %v154 = vmul.f32 %v124, %v133
    %v155 = vmul.f32 %v125, %v137
    %v156 = vmul.f32 %v126, %v141
    %v157 = vmul.f32 %v127, %v145
    %v158 = vld [vmem:[#allocation7] sm:$0xf]
    %v160 = vlaneseq
    %v161 = vshrl.u32 %v160, 7
    %v162 = vsub.s32 0, %v161
    %v163 = vrot.slane %v158, %v162
    %v164 = vlaneseq
    %v165 = vshrl.u32 %v164, 7
    %v166 = vsub.s32 1, %v165
    %v167 = vrot.slane %v158, %v166
    %v168 = vlaneseq
    %v169 = vshrl.u32 %v168, 7
    %v170 = vsub.s32 2, %v169
    %v171 = vrot.slane %v158, %v170
    %v172 = vlaneseq
    %v173 = vshrl.u32 %v172, 7
    %v174 = vsub.s32 3, %v173
    %v175 = vrot.slane %v158, %v174
    %v180 = vadd.f32 %v150, %v163
    %v181 = vadd.f32 %v151, %v167
    %v182 = vadd.f32 %v152, %v171
    %v183 = vadd.f32 %v153, %v175
    %v184 = vadd.f32 %v154, %v163
    %v185 = vadd.f32 %v155, %v167
    %v186 = vadd.f32 %v156, %v171
    %v187 = vadd.f32 %v157, %v175
    %188 = vst [vmem:[#allocation8] sm:$0xff] %v180
    %189 = vst [vmem:[#allocation8 + $0x8] sm:$0xff] %v181
    %190 = vst [vmem:[#allocation8 + $0x10] sm:$0xff] %v182
    %191 = vst [vmem:[#allocation8 + $0x18] sm:$0xff] %v183
    %192 = vst [vmem:[#allocation8 + $0x20] sm:$0xff] %v184
    %193 = vst [vmem:[#allocation8 + $0x28] sm:$0xff] %v185
    %194 = vst [vmem:[#allocation8 + $0x30] sm:$0xff] %v186
    %195 = vst [vmem:[#allocation8 + $0x38] sm:$0xff] %v187
    // Predicated region
    $region26: #{tpu_custom_call.1} parent=1 // pred_check
      _
    $region27: #{tpu_custom_call.1} parent=1 // pred_check_branch
      %197 = sbr.rel (0) target = $region29
    $region28: #{tpu_custom_call.1} parent=1 // pred_region
      %s199 = ssub.s32 1024, 1024
      %200 = vsyncadd [#allocation4], %s199
      %s201 = sshll.u32 [#allocation8], 4
      %s202 = int_to_ptr.vmem [resolvable:$true] %s201
      %207 = dma.vmem_to_hbm [thread:$0]  %s202, 1024, %s3, [#allocation4], 512, 512, 32
    $region29: #{tpu_custom_call.1} parent=1 // pred_fallthru
      _
    // Predicated region
    $region30: #{tpu_custom_call.1} parent=1 // pred_check
      _
    $region31: #{tpu_custom_call.1} parent=1 // pred_check_branch
      %209 = sbr.rel (0) target = $region33
    $region32: #{tpu_custom_call.1} parent=1 // pred_region
      %210 = dma.done [#allocation4], 1024
    $region33: #{tpu_custom_call.1} parent=1 // pred_fallthru
      _
    %211 = vsyncpa [#allocation3], 1
    %212 = vsyncpa [#allocation6], 1
    %213 = vsyncpa [#allocation4], 1

</llo_original>
